<compile_context>
chip_gen: v7x
topology: tpu7x:2x2x1
jax: 0.10.0
libtpu: 0.0.40
codegen_flags: <defaults>
</compile_context>

<pallas_src>
import functools

import jax
import jax.numpy as jnp
from jax.experimental import pallas as pl
from jax.experimental.pallas import tpu as pltpu

_LANE = 128
_SUB = 8


def _hw_info():
    """(num_tensorcores, vmem_capacity_bytes) with safe fallbacks."""
    vmem_cap = 128 * 1024 * 1024
    num_tc = 1
    try:
        info = pltpu.get_tpu_info()
        vmem_cap = int(getattr(info, "vmem_capacity_bytes", vmem_cap))
        for attr in ("num_cores", "num_tensorcores", "tensorcore_count"):
            val = getattr(info, attr, None)
            if val:
                num_tc = int(val)
                break
    except Exception:
        pass
    if num_tc <= 1:
        try:
            kind = jax.local_devices()[0].device_kind.lower()
            if "v7" in kind:        # v7x: 2 TensorCores per chip
                num_tc = 2
        except Exception:
            pass
    return max(1, min(num_tc, 2)), max(8 << 20, vmem_cap)


def _align_sq_dist_kernel(zis_ref, zjs_ref, out_ref, *, block_rows, sub_rows,
                          n_rows, blocks_per_p, n_blocks, width, num_parallel):
    i = pl.program_id(1)

    @pl.when(i == 0)
    def _init():
        out_ref[...] = jnp.zeros_like(out_ref)

    g = pl.program_id(0) * blocks_per_p + i          # global block id
    n_sub = block_rows // sub_rows

    def _accumulate(mask_tail):
        def body(t, acc):
            r0 = pl.multiple_of(t * sub_rows, sub_rows)
            zi = zis_ref[pl.ds(r0, sub_rows), :].astype(jnp.float32)
            zj = zjs_ref[pl.ds(r0, sub_rows), :].astype(jnp.float32)
            diff = zi - zj
            sq = diff * diff
            if mask_tail:
                # Zero rows past the end of the (ragged) last block before
                # accumulating, so Pallas' unspecified padding never leaks in.
                row_ids = (g * block_rows + r0
                           + jax.lax.broadcasted_iota(jnp.int32, sq.shape, 0))
                sq = jnp.where(row_ids < n_rows, sq, 0.0)
            # Fold sublane groups onto the (8, W) slab: pure vreg-wise VPU
            # adds, no per-step cross-lane reduction.
            return acc + sq.reshape(sub_rows // _SUB, _SUB, width).sum(axis=0)

        acc = jax.lax.fori_loop(0, n_sub, body,
                                jnp.zeros((_SUB, width), jnp.float32))
        out_ref[...] += acc[None]

    tail_ragged = (n_rows % block_rows) != 0
    has_dup = (num_parallel * blocks_per_p) != n_blocks
    n_full = n_blocks - 1 if tail_ragged else n_blocks

    if not tail_ragged and not has_dup:
        _accumulate(mask_tail=False)
    else:
        @pl.when(g < n_full)
        def _full_blocks():
            _accumulate(mask_tail=False)

        if tail_ragged:
            @pl.when(g == n_blocks - 1)
            def _tail_block():
                _accumulate(mask_tail=True)
        # g >= n_blocks: duplicated (clamped) blocks from the parallel split
        # contribute nothing; compute is skipped entirely.


def _xla_align(zis, zjs, b):
    diff = zis.astype(jnp.float32) - zjs.astype(jnp.float32)
    return jnp.sum(diff * diff) / jnp.float32(b)


def align_score(zis: jax.Array, zjs: jax.Array, *,
                max_block_rows: int | None = None) -> jax.Array:
    """Mean squared L2 distance between rows of zis and zjs (Align_score.forward)."""
    assert zis.shape == zjs.shape and zis.ndim == 2
    b, d = zis.shape
    total = b * d
    itemsize = jnp.dtype(zis.dtype).itemsize

    # Zero-copy 2-D view for the flat sum-of-squares reduction.
    if total % _LANE == 0:
        width = _LANE
        n_rows = total // _LANE
        zi = zis.reshape(n_rows, _LANE)       # bitcast reshape, no data movement
        zj = zjs.reshape(n_rows, _LANE)
    else:
        width = d                             # lane-sparse but still zero-copy
        n_rows = b
        zi, zj = zis, zjs

    num_tc, vmem_cap = _hw_info()

    # DMA block sizing by bytes: 2 inputs x 2 pipeline buffers x block_bytes
    # ~= vmem_cap / 4  => ~8 MiB/input on 128 MiB parts, ~4 MiB on v7x (64 MiB).
    row_mult = 16 if itemsize < 4 else _SUB
    block_bytes = max(1 << 20, min(vmem_cap, 128 << 20) // 16)
    cap_rows = max(row_mult,
                   (block_bytes // (width * itemsize)) // row_mult * row_mult)
    if max_block_rows is not None:
        cap_rows = min(cap_rows,
                       max(row_mult, (max_block_rows // row_mult) * row_mult))

    # In-kernel sub-chunk (~256 KiB of f32 temporaries) so large DMA blocks do
    # not force large elementwise temporaries in VMEM.
    sub_rows = max(row_mult,
                   min(cap_rows, ((256 << 10) // (width * 4)) // row_mult * row_mult))
    block_rows = max(sub_rows, (cap_rows // sub_rows) * sub_rows)
    n_blocks = -(-n_rows // block_rows)
    block_vmem = block_rows * width * itemsize

    # Fast paths: tiny (single-block) inputs, or blocks that cannot fit VMEM
    # (huge non-128-divisible feature dim) -> fused XLA reduce.
    if n_blocks < 2 or 4 * block_vmem > (vmem_cap * 3) // 4:
        return _xla_align(zis, zjs, b)

    # 2-way TensorCore split only on 2-TC parts (v7x) and only when it does
    # not create a wasteful duplicated tail-block DMA on small grids.
    use_two = (num_tc >= 2 and (n_blocks % 2 == 0 or n_blocks >= 8))
    num_parallel = 2 if use_two else 1
    blocks_per_p = -(-n_blocks // num_parallel)

    def in_index(p, i):
        # Clamp so the (at most one) extra iteration of the parallel split
        # re-reads a valid block; the kernel skips its compute.
        return (jnp.minimum(p * blocks_per_p + i, n_blocks - 1), 0)

    kernel = functools.partial(
        _align_sq_dist_kernel,
        block_rows=block_rows, sub_rows=sub_rows, n_rows=n_rows,
        blocks_per_p=blocks_per_p, n_blocks=n_blocks, width=width,
        num_parallel=num_parallel)

    vmem_limit = int(min(vmem_cap, max(32 << 20, 4 * block_vmem + (16 << 20))))

    partials = pl.pallas_call(
        kernel,
        out_shape=jax.ShapeDtypeStruct((num_parallel, _SUB, width), jnp.float32),
        grid_spec=pltpu.PrefetchScalarGridSpec(
            num_scalar_prefetch=0,
            grid=(num_parallel, blocks_per_p),
            in_specs=[
                pl.BlockSpec((block_rows, width), in_index),
                pl.BlockSpec((block_rows, width), in_index),
            ],
            out_specs=pl.BlockSpec((1, _SUB, width), lambda p, i: (p, 0, 0)),
        ),
        compiler_params=pltpu.CompilerParams(
            dimension_semantics=("parallel", "arbitrary"),
            vmem_limit_bytes=vmem_limit,
        ),
    )(zi, zj)

    # Tiny final cross-lane reduction + mean over batch in plain XLA.
    return jnp.sum(partials) / jnp.float32(b)


def _ref_align_score(zis, zjs):
    diff = zis.astype(jnp.float32) - zjs.astype(jnp.float32)
    return jnp.mean(jnp.sum(diff * diff, axis=1))


if __name__ == "__main__":
    key = jax.random.PRNGKey(0)
    k1, k2, k3, k4, k5, k6 = jax.random.split(key, 6)

    # 1) Nominal module shape (batch=8, hidden=32): exercises the XLA fast path.
    zis = jax.random.normal(k1, (8, 32), dtype=jnp.float32)
    zjs = jax.random.normal(k2, (8, 32), dtype=jnp.float32)
    out = align_score(zis, zjs)
    jax.block_until_ready(out)
    ref = _ref_align_score(zis, zjs)
    assert jnp.allclose(out, ref, rtol=1e-5, atol=1e-5), (out, ref)

    # 2) Lane-dense Pallas path: multi-block grid with a ragged tail block
    #    (and the 2-way core split on 2-TC parts). Small blocks forced so the
    #    test stays tiny while still exercising the kernel.
    zis2 = jax.random.normal(k3, (26, 128), dtype=jnp.float32)
    zjs2 = jax.random.normal(k4, (26, 128), dtype=jnp.float32)
    out2 = align_score(zis2, zjs2, max_block_rows=8)
    jax.block_until_ready(out2)
    ref2 = _ref_align_score(zis2, zjs2)
    assert jnp.allclose(out2, ref2, rtol=1e-5, atol=1e-5), (out2, ref2)

    # 3) bf16 inputs on the direct (b, d) path (b*d not a multiple of 128),
    #    with a ragged tail block and 16-row (bf16-tile-aligned) blocks.
    zis3 = jax.random.normal(k5, (40, 40), dtype=jnp.bfloat16)
    zjs3 = jax.random.normal(k6, (40, 40), dtype=jnp.bfloat16)
    out3 = align_score(zis3, zjs3, max_block_rows=16)
    jax.block_until_ready(out3)
    ref3 = _ref_align_score(zis3, zjs3)
    assert jnp.allclose(out3, ref3, rtol=1e-4, atol=1e-4), (out3, ref3)

    print("KERNEL_OK")
</pallas_src>

<mosaic_0001>
module attributes {stable_mosaic.version = 11 : i64} {
  func.func @_align_sq_dist_kernel(%arg0: i32, %arg1: i32, %arg2: memref<8x128xf32, #tpu.memory_space<vmem>>, %arg3: memref<8x128xf32, #tpu.memory_space<vmem>>, %arg4: memref<1x8x128xf32, #tpu.memory_space<vmem>>) attributes {dimension_semantics = [#tpu.dimension_semantics<parallel>, #tpu.dimension_semantics<arbitrary>], iteration_bounds = array<i64: 1, 4>, scalar_prefetch = 0 : i64, scratch_operands = 0 : i64, tpu.core_type = #tpu.core_type<tc>, window_params = [{transform_indices = @transform_0, window_bounds = array<i64: 8, 128>}, {transform_indices = @transform_1, window_bounds = array<i64: 8, 128>}, {transform_indices = @transform_2, window_bounds = array<i64: 1, 8, 128>}]} {
    %c0_i32 = arith.constant 0 : i32
    %0 = arith.cmpi eq, %arg1, %c0_i32 : i32
    %1 = arith.extui %0 : i1 to i32
    %c0_i32_0 = arith.constant 0 : i32
    %2 = arith.cmpi ne, %1, %c0_i32_0 : i32
    scf.if %2 {
      %cst = arith.constant 0.000000e+00 : f32
      %11 = vector.broadcast %cst : f32 to vector<1x8x128xf32>
      %c0 = arith.constant 0 : index
      %c0_4 = arith.constant 0 : index
      %c0_5 = arith.constant 0 : index
      %12 = vector.load %arg4[%c0, %c0_4, %c0_5] : memref<1x8x128xf32, #tpu.memory_space<vmem>>, vector<1x8x128xf32>
      tpu.vector_store %arg4[%c0, %c0_4, %c0_5], %11 {strides = array<i32>} : memref<1x8x128xf32, #tpu.memory_space<vmem>>, vector<1x8x128xf32>,
    } else {
    }
    %c4_i32 = arith.constant 4 : i32
    %3 = arith.muli %arg0, %c4_i32 : i32
    %4 = arith.addi %3, %arg1 : i32
    %c3_i32 = arith.constant 3 : i32
    %5 = arith.cmpi slt, %4, %c3_i32 : i32
    %6 = arith.extui %5 : i1 to i32
    %c0_i32_1 = arith.constant 0 : i32
    %7 = arith.cmpi ne, %6, %c0_i32_1 : i32
    scf.if %7 {
      %cst = arith.constant 0.000000e+00 : f32
      %11 = vector.broadcast %cst : f32 to vector<8x128xf32>
      %c0_i32_4 = arith.constant 0 : i32
      %c8_i32 = arith.constant 8 : i32
      %12 = arith.muli %c0_i32_4, %c8_i32 : i32
      %13 = tpu.assume_multiple %12, 8 : i32
      %14 = arith.index_cast %13 : i32 to index
      %c0 = arith.constant 0 : index
      %15 = vector.load %arg2[%14, %c0] : memref<8x128xf32, #tpu.memory_space<vmem>>, vector<8x128xf32>
      %16 = arith.index_cast %13 : i32 to index
      %c0_5 = arith.constant 0 : index
      %17 = vector.load %arg3[%16, %c0_5] : memref<8x128xf32, #tpu.memory_space<vmem>>, vector<8x128xf32>
      %18 = arith.subf %15, %17 : vector<8x128xf32>
      %19 = arith.mulf %18, %18 : vector<8x128xf32>
      %20 = vector.shape_cast %19 : vector<8x128xf32> to vector<1x8x128xf32>
      %cst_6 = arith.constant dense<0.000000e+00> : vector<8x128xf32>
      %21 = vector.multi_reduction <add>, %20, %cst_6 [0] : vector<1x8x128xf32> to vector<8x128xf32>
      %22 = arith.addf %11, %21 : vector<8x128xf32>
      %c1_i32 = arith.constant 1 : i32
      %c0_7 = arith.constant 0 : index
      %c0_8 = arith.constant 0 : index
      %c0_9 = arith.constant 0 : index
      %23 = vector.load %arg4[%c0_7, %c0_8, %c0_9] : memref<1x8x128xf32, #tpu.memory_space<vmem>>, vector<1x8x128xf32>
      %24 = vector.shape_cast %22 : vector<8x128xf32> to vector<1x8x128xf32>
      %25 = arith.addf %23, %24 : vector<1x8x128xf32>
      %c0_10 = arith.constant 0 : index
      %c0_11 = arith.constant 0 : index
      %c0_12 = arith.constant 0 : index
      %26 = vector.load %arg4[%c0_10, %c0_11, %c0_12] : memref<1x8x128xf32, #tpu.memory_space<vmem>>, vector<1x8x128xf32>
      tpu.vector_store %arg4[%c0_10, %c0_11, %c0_12], %25 {strides = array<i32>} : memref<1x8x128xf32, #tpu.memory_space<vmem>>, vector<1x8x128xf32>,
    } else {
    }
    %c3_i32_2 = arith.constant 3 : i32
    %8 = arith.cmpi eq, %4, %c3_i32_2 : i32
    %9 = arith.extui %8 : i1 to i32
    %c0_i32_3 = arith.constant 0 : i32
    %10 = arith.cmpi ne, %9, %c0_i32_3 : i32
    scf.if %10 {
      %cst = arith.constant 0.000000e+00 : f32
      %11 = vector.broadcast %cst : f32 to vector<8x128xf32>
      %c0_i32_4 = arith.constant 0 : i32
      %c8_i32 = arith.constant 8 : i32
      %12 = arith.muli %c0_i32_4, %c8_i32 : i32
      %13 = tpu.assume_multiple %12, 8 : i32
      %14 = arith.index_cast %13 : i32 to index
      %c0 = arith.constant 0 : index
      %15 = vector.load %arg2[%14, %c0] : memref<8x128xf32, #tpu.memory_space<vmem>>, vector<8x128xf32>
      %16 = arith.index_cast %13 : i32 to index
      %c0_5 = arith.constant 0 : index
      %17 = vector.load %arg3[%16, %c0_5] : memref<8x128xf32, #tpu.memory_space<vmem>>, vector<8x128xf32>
      %18 = arith.subf %15, %17 : vector<8x128xf32>
      %19 = arith.mulf %18, %18 : vector<8x128xf32>
      %c8_i32_6 = arith.constant 8 : i32
      %20 = arith.muli %4, %c8_i32_6 : i32
      %21 = arith.addi %20, %13 : i32
      %22 = tpu.iota {dimensions = array<i32: 0>} : vector<8x128xi32>
      %23 = vector.broadcast %21 : i32 to vector<8x128xi32>
      %24 = arith.addi %23, %22 : vector<8x128xi32>
      %c26_i32 = arith.constant 26 : i32
      %25 = vector.broadcast %c26_i32 : i32 to vector<8x128xi32>
      %26 = arith.cmpi slt, %24, %25 : vector<8x128xi32>
      %cst_7 = arith.constant 0.000000e+00 : f32
      %27 = vector.broadcast %cst_7 : f32 to vector<8x128xf32>
      %28 = arith.select %26, %19, %27 : vector<8x128xi1>, vector<8x128xf32>
      %29 = vector.shape_cast %28 : vector<8x128xf32> to vector<1x8x128xf32>
      %cst_8 = arith.constant dense<0.000000e+00> : vector<8x128xf32>
      %30 = vector.multi_reduction <add>, %29, %cst_8 [0] : vector<1x8x128xf32> to vector<8x128xf32>
      %31 = arith.addf %11, %30 : vector<8x128xf32>
      %c1_i32 = arith.constant 1 : i32
      %c0_9 = arith.constant 0 : index
      %c0_10 = arith.constant 0 : index
      %c0_11 = arith.constant 0 : index
      %32 = vector.load %arg4[%c0_9, %c0_10, %c0_11] : memref<1x8x128xf32, #tpu.memory_space<vmem>>, vector<1x8x128xf32>
      %33 = vector.shape_cast %31 : vector<8x128xf32> to vector<1x8x128xf32>
      %34 = arith.addf %32, %33 : vector<1x8x128xf32>
      %c0_12 = arith.constant 0 : index
      %c0_13 = arith.constant 0 : index
      %c0_14 = arith.constant 0 : index
      %35 = vector.load %arg4[%c0_12, %c0_13, %c0_14] : memref<1x8x128xf32, #tpu.memory_space<vmem>>, vector<1x8x128xf32>
      tpu.vector_store %arg4[%c0_12, %c0_13, %c0_14], %34 {strides = array<i32>} : memref<1x8x128xf32, #tpu.memory_space<vmem>>, vector<1x8x128xf32>,
    } else {
    }
    return
  }
  func.func @transform_0(%arg0: i32, %arg1: i32) -> (i32, i32) {
    %c4_i32 = arith.constant 4 : i32
    %0 = arith.muli %arg0, %c4_i32 : i32
    %1 = arith.addi %0, %arg1 : i32
    %c3_i32 = arith.constant 3 : i32
    %2 = arith.minsi %1, %c3_i32 : i32
    %c0_i32 = arith.constant 0 : i32
    %c0_i32_0 = arith.constant 0 : i32
    return %2, %c0_i32 : i32, i32
  }
  func.func @transform_1(%arg0: i32, %arg1: i32) -> (i32, i32) {
    %c4_i32 = arith.constant 4 : i32
    %0 = arith.muli %arg0, %c4_i32 : i32
    %1 = arith.addi %0, %arg1 : i32
    %c3_i32 = arith.constant 3 : i32
    %2 = arith.minsi %1, %c3_i32 : i32
    %c0_i32 = arith.constant 0 : i32
    %c0_i32_0 = arith.constant 0 : i32
    return %2, %c0_i32 : i32, i32
  }
  func.func @transform_2(%arg0: i32, %arg1: i32) -> (i32, i32, i32) {
    %c0_i32 = arith.constant 0 : i32
    %c0_i32_0 = arith.constant 0 : i32
    %c0_i32_1 = arith.constant 0 : i32
    return %arg0, %c0_i32, %c0_i32_0 : i32, i32, i32
  }
}

</mosaic_0001>

<llo_original>
// kernel: tpu_custom_call.1
$region0: #{tpu_custom_call.1}
  #allocation0 [shape = 'u32[]', space=smem, size = 0x4, offset = 0x4, fixed_abs, tag = 'smem constant byte address 0x4 - core index']
  #allocation1 [shape = 'u32[144,128]{1,0:T(1,128)}', space=vmem, size = 0x12000, scoped, tag = 'internal scratch']
  %s0 = inlined_call_operand.hbm [shape: f32[26,128], index: 0, kind: input, shape index: {}]
  %s1 = inlined_call_operand.hbm [shape: f32[26,128], index: 1, kind: input, shape index: {}]
  %s2 = inlined_call_operand.hbm [shape: f32[1,8,128], index: 2, kind: output, shape index: {}]
  %s3 = sld [smem:[#allocation0]]
  $region61: #{tpu_custom_call.1} parent=0
    _
  %s5 = ssub.s32 1, %s3
  %s6 = scalar_select 0, %s5, %s3
  $region1: #{tpu_custom_call.1} parent=0
    #allocation2 [shape = 'u8[8192]{0}', space=vmem, size = 0x2000, scoped, tag = 'input window, operand 0']
    #allocation3 [shape = 's32[2]{0}', space=sflag, size = 0x8, scoped, tag = 'scoped memory for tpu_custom_call.1']
    #allocation4 [shape = 's32[2]{0}', space=sflag, size = 0x8, scoped, tag = 'scoped memory for tpu_custom_call.1']
    #allocation5 [shape = 'u8[8192]{0}', space=vmem, size = 0x2000, scoped, tag = 'input window, operand 1']
    #allocation6 [shape = 's32[2]{0}', space=sflag, size = 0x8, scoped, tag = 'scoped memory for tpu_custom_call.1']
    #allocation7 [shape = 'u8[4096]{0}', space=vmem, size = 0x1000, scoped, tag = 'output window, operand 0, single buffered']
    %7 = vsyncpa [#allocation3], 0
    %s8 = scalar_lea.sflag [#allocation3], 1
    %9 = vsyncpa %s8, 0
    %10 = vsyncpa [#allocation6], 0
    %s11 = scalar_lea.sflag [#allocation6], 1
    %12 = vsyncpa %s11, 0
    %13 = vsyncpa [#allocation4], 0
    loop: start=0, step=1, limit=6
    $region2: #{tpu_custom_call.1} parent=1 // loop_pre_header
      _
    $region3: #{tpu_custom_call.1} parent=1 // loop_header
      %s15 = sphi 0, %s19
      %p16 = scmp.ge.s32.totalorder %s15, 6
      %s22 = sphi 0, %s34
      %s23 = sphi 0, %s30
      %s24 = sphi 0, %s22
      %s25 = sphi 0, %s23
      %s26 = sphi 0, %s24
      %s27 = sphi 0, %s25
      %s45 = sphi 0, %s47
      %s48 = sphi 0, %s45
      %s49 = sphi 0, %s48
      %s65 = sphi 0, %s49
      %s79 = sphi 0, %s81
      %s82 = sphi 0, %s79
      %s83 = sphi 0, %s82
      %s99 = sphi 0, %s83
      %s105 = sphi 0, %s107
      %s108 = sphi 0, %s105
      %s109 = sphi 0, %s108
      %s125 = sphi 0, %s109
    $region4: #{tpu_custom_call.1} parent=1 // loop_header_branch
      %18 = sbr.rel (%p16) target = $region8
    $region5: #{tpu_custom_call.1} parent=1 // loop_body
      %s20 = ssub.s32 %s15, 1
      %s21 = ssub.s32 %s15, 2
      %s28 = sadd.s32 1, %s23
      %p29 = scmp.ge.s32.totalorder %s28, 4
      %s30 = scalar_select %p29, 0, %s28
      %s31 = sadd.s32 1, %s22
      %s32 = scalar_select %p29, %s31, %s22
      %p33 = scmp.ge.s32.totalorder %s32, 1
      %s34 = scalar_select %p33, 0, %s32
      %s35 = smul.u32 %s22, 4
      %s36 = sadd.s32 %s35, %s23
      %p37 = scmp.lt.s32.totalorder %s36, 3
      %s38 = scalar_select %p37, %s36, 3
      %s39 = smul.u32 %s34, 4
      %s40 = sadd.s32 %s39, %s30
      %p41 = scmp.lt.s32.totalorder %s40, 3
      %s42 = scalar_select %p41, %s40, 3
      %s43 = ssub.s32 %s38, %s42
      %p44 = scmp.eq.s32.totalorder %s43, 0
      %s46 = sadd.s32 %s45, 1
      %s47 = scalar_select %p44, %s45, %s46
      %p50 = pneg %p44
      %p51 = scmp.eq.s32.totalorder %s15, 3
      %p52 = por %p50, %p51
      %p53 = scmp.ne.s32.totalorder %s45, %s48
      %p54 = scmp.eq.s32.totalorder %s15, 0
      %p55 = por %p53, %p54
      %p56 = scmp.ne.s32.totalorder %s45, %s48
      %p57 = scmp.eq.s32.totalorder %s20, 3
      %p58 = por %p56, %p57
      %p59 = scmp.ne.s32.totalorder %s48, %s49
      %p60 = scmp.eq.s32.totalorder %s20, 0
      %p61 = por %p59, %p60
      %p62 = scmp.ne.s32.totalorder %s48, %s49
      %p63 = scmp.eq.s32.totalorder %s21, 3
      %p64 = por %p62, %p63
      %p66 = scmp.ne.s32.totalorder %s49, %s65
      %p67 = scmp.eq.s32.totalorder %s21, 0
      %p68 = por %p66, %p67
      %s69 = smul.u32 %s22, 4
      %s70 = sadd.s32 %s69, %s23
      %p71 = scmp.lt.s32.totalorder %s70, 3
      %s72 = scalar_select %p71, %s70, 3
      %s73 = smul.u32 %s34, 4
      %s74 = sadd.s32 %s73, %s30
      %p75 = scmp.lt.s32.totalorder %s74, 3
      %s76 = scalar_select %p75, %s74, 3
      %s77 = ssub.s32 %s72, %s76
      %p78 = scmp.eq.s32.totalorder %s77, 0
      %s80 = sadd.s32 %s79, 1
      %s81 = scalar_select %p78, %s79, %s80
      %p84 = pneg %p78
      %p85 = scmp.eq.s32.totalorder %s15, 3
      %p86 = por %p84, %p85
      %p87 = scmp.ne.s32.totalorder %s79, %s82
      %p88 = scmp.eq.s32.totalorder %s15, 0
      %p89 = por %p87, %p88
      %p90 = scmp.ne.s32.totalorder %s79, %s82
      %p91 = scmp.eq.s32.totalorder %s20, 3
      %p92 = por %p90, %p91
      %p93 = scmp.ne.s32.totalorder %s82, %s83
      %p94 = scmp.eq.s32.totalorder %s20, 0
      %p95 = por %p93, %p94
      %p96 = scmp.ne.s32.totalorder %s82, %s83
      %p97 = scmp.eq.s32.totalorder %s21, 3
      %p98 = por %p96, %p97
      %p100 = scmp.ne.s32.totalorder %s83, %s99
      %p101 = scmp.eq.s32.totalorder %s21, 0
      %p102 = por %p100, %p101
      %s103 = ssub.s32 %s22, %s34
      %p104 = scmp.eq.s32.totalorder %s103, 0
      %s106 = sadd.s32 %s105, 1
      %s107 = scalar_select %p104, %s105, %s106
      %p110 = pneg %p104
      %p111 = scmp.eq.s32.totalorder %s15, 3
      %p112 = por %p110, %p111
      %p113 = scmp.ne.s32.totalorder %s105, %s108
      %p114 = scmp.eq.s32.totalorder %s15, 0
      %p115 = por %p113, %p114
      %p116 = scmp.ne.s32.totalorder %s105, %s108
      %p117 = scmp.eq.s32.totalorder %s20, 3
      %p118 = por %p116, %p117
      %p119 = scmp.ne.s32.totalorder %s108, %s109
      %p120 = scmp.eq.s32.totalorder %s20, 0
      %p121 = por %p119, %p120
      %p122 = scmp.ne.s32.totalorder %s108, %s109
      %p123 = scmp.eq.s32.totalorder %s21, 3
      %p124 = por %p122, %p123
      %p126 = scmp.ne.s32.totalorder %s109, %s125
      %p127 = scmp.eq.s32.totalorder %s21, 0
      %p128 = por %p126, %p127
      %p129 = scmp.le.s32.totalorder 1, %s15
      %p130 = scmp.lt.s32.totalorder %s15, 5
      %p131 = pnand %p129, %p130
      %p132 = pneg %p131
      // Predicated region
      $region9: #{tpu_custom_call.1} parent=5 // pred_check
        _
      $region10: #{tpu_custom_call.1} parent=5 // pred_check_branch
        %134 = sbr.rel (%p131) target = $region12
      $region11: #{tpu_custom_call.1} parent=5 // pred_region
        %s135 = ssub.s32 %s15, 1
      $region12: #{tpu_custom_call.1} parent=5 // pred_fallthru
        _
      %p136 = scmp.lt.s32.totalorder %s15, 4
      // Predicated region
      $region13: #{tpu_custom_call.1} parent=5 // pred_check
        %p137 = pneg %p136
      $region14: #{tpu_custom_call.1} parent=5 // pred_check_branch
        %139 = sbr.rel (%p137) target = $region16
      $region15: #{tpu_custom_call.1} parent=5 // pred_region
        // Predicated region
        $region17: #{tpu_custom_call.1} parent=15 // pred_check
          %p140 = pneg %p55
        $region18: #{tpu_custom_call.1} parent=15 // pred_check_branch
          %142 = sbr.rel (%p140) target = $region20
        $region19: #{tpu_custom_call.1} parent=15 // pred_region
          %s143 = sand.u32 %s45, 1
          %s144 = scalar_lea.sflag [#allocation3], %s143
          %s145 = sand.u32 %s45, 1
          %s146 = smul.addr %s145, 8
          %s147 = scalar_lea.vmem [#allocation2], %s146
          %s148 = smul.u32 %s22, 4
          %s149 = sadd.s32 %s148, %s23
          %p150 = scmp.lt.s32.totalorder %s149, 3
          %s151 = scalar_select %p150, %s149, 3
          %s153 = ssub.s32 128, 128
          %154 = vsyncadd %s144, %s153
          %s155 = smul.addr %s151, 128
          %s156 = scalar_lea.hbm %s0, %s155
          %s158 = sshll.u32 %s147, 4
          %s159 = int_to_ptr.vmem [resolvable:$true] %s158
          %161 = dma.hbm_to_vmem [thread:$0]  %s156, 128, %s159, %s144
        $region20: #{tpu_custom_call.1} parent=15 // pred_fallthru
          _
        // Predicated region
        $region21: #{tpu_custom_call.1} parent=15 // pred_check
          %p162 = pneg %p89
        $region22: #{tpu_custom_call.1} parent=15 // pred_check_branch
          %164 = sbr.rel (%p162) target = $region24
        $region23: #{tpu_custom_call.1} parent=15 // pred_region
          %s165 = sand.u32 %s79, 1
          %s166 = scalar_lea.sflag [#allocation6], %s165
          %s167 = sand.u32 %s79, 1
          %s168 = smul.addr %s167, 8
          %s169 = scalar_lea.vmem [#allocation5], %s168
          %s170 = smul.u32 %s22, 4
          %s171 = sadd.s32 %s170, %s23
          %p172 = scmp.lt.s32.totalorder %s171, 3
          %s173 = scalar_select %p172, %s171, 3
          %s175 = ssub.s32 128, 128
          %176 = vsyncadd %s166, %s175
          %s177 = smul.addr %s173, 128
          %s178 = scalar_lea.hbm %s1, %s177
          %s180 = sshll.u32 %s169, 4
          %s181 = int_to_ptr.vmem [resolvable:$true] %s180
          %183 = dma.hbm_to_vmem [thread:$0]  %s178, 128, %s181, %s166
        $region24: #{tpu_custom_call.1} parent=15 // pred_fallthru
          _
      $region16: #{tpu_custom_call.1} parent=5 // pred_fallthru
        _
      %p184 = scmp.le.s32.totalorder 1, %s15
      %p185 = scmp.lt.s32.totalorder %s15, 5
      %p186 = pnand %p184, %p185
      %p187 = pneg %p186
      // Predicated region
      $region25: #{tpu_custom_call.1} parent=5 // pred_check
        _
      $region26: #{tpu_custom_call.1} parent=5 // pred_check_branch
        %189 = sbr.rel (%p186) target = $region28
      $region27: #{tpu_custom_call.1} parent=5 // pred_region
        %s190 = ssub.s32 %s15, 1
        %s191 = sand.u32 %s48, 1
        %s192 = scalar_lea.sflag [#allocation3], %s191
        %s193 = sand.u32 %s48, 1
        %s194 = smul.addr %s193, 8
        %s195 = scalar_lea.vmem [#allocation2], %s194
        // Predicated region
        $region29: #{tpu_custom_call.1} parent=27 // pred_check
          %p196 = pneg %p61
        $region30: #{tpu_custom_call.1} parent=27 // pred_check_branch
          %198 = sbr.rel (%p196) target = $region32
        $region31: #{tpu_custom_call.1} parent=27 // pred_region
          %199 = dma.done %s192, 128
        $region32: #{tpu_custom_call.1} parent=27 // pred_fallthru
          _
        %s200 = sand.u32 %s82, 1
        %s201 = scalar_lea.sflag [#allocation6], %s200
        %s202 = sand.u32 %s82, 1
        %s203 = smul.addr %s202, 8
        %s204 = scalar_lea.vmem [#allocation5], %s203
        // Predicated region
        $region33: #{tpu_custom_call.1} parent=27 // pred_check
          %p205 = pneg %p95
        $region34: #{tpu_custom_call.1} parent=27 // pred_check_branch
          %207 = sbr.rel (%p205) target = $region36
        $region35: #{tpu_custom_call.1} parent=27 // pred_region
          %208 = dma.done %s201, 128
        $region36: #{tpu_custom_call.1} parent=27 // pred_fallthru
          _
        %s209 = sand.u32 %s48, 1
        %s210 = scalar_lea.sflag [#allocation3], %s209
        %s211 = sand.u32 %s48, 1
        %s212 = smul.addr %s211, 8
        %s213 = scalar_lea.vmem [#allocation2], %s212
        %p214 = pneg %p61
        %p215 = pneg %p58
        %s216 = sand.u32 %s82, 1
        %s217 = scalar_lea.sflag [#allocation6], %s216
        %s218 = sand.u32 %s82, 1
        %s219 = smul.addr %s218, 8
        %s220 = scalar_lea.vmem [#allocation5], %s219
        %p221 = pneg %p95
        %p222 = pneg %p92
        %p223 = pneg %p121
        %p224 = pneg %p118
        %s225 = smul.u32 %s24, 4
        %s226 = sadd.s32 %s225, %s25
        %p227 = scmp.lt.s32.totalorder %s226, 3
        %s228 = scalar_select %p227, %s226, 3
        %s229 = smul.u32 %s24, 4
        %s230 = sadd.s32 %s229, %s25
        %p231 = scmp.lt.s32.totalorder %s230, 3
        %s232 = scalar_select %p231, %s230, 3
        %p233 = scmp.eq.s32.totalorder %s25, 0
        // Predicated region
        $region37: #{tpu_custom_call.1} parent=27 // pred_check
          %p234 = pneg %p233
        $region38: #{tpu_custom_call.1} parent=27 // pred_check_branch
          %236 = sbr.rel (%p234) target = $region40
        $region39: #{tpu_custom_call.1} parent=27 // pred_region
          %237 = vst [vmem:[#allocation7] sm:$0xff] 0.0
        $region40: #{tpu_custom_call.1} parent=27 // pred_fallthru
          _
        %s238 = smul.u32 %s24, 4
        %s239 = sadd.s32 %s238, %s25
        %p240 = scmp.lt.s32.totalorder %s239, 3
        // Predicated region
        $region41: #{tpu_custom_call.1} parent=27 // pred_check
          %p241 = pneg %p240
        $region42: #{tpu_custom_call.1} parent=27 // pred_check_branch
          %243 = sbr.rel (%p241) target = $region44
        $region43: #{tpu_custom_call.1} parent=27 // pred_region
          %v244 = vld [vmem:[%s195] sm:$0xff]
          %v245 = vld [vmem:[%s204] sm:$0xff]
          %v246 = vsub.f32 %v244, %v245
          %v247 = vmul.f32 %v246, %v246
          %v248 = vadd.f32 %v247, 0.0
          %v249 = vadd.f32 %v248, 0.0
          %v250 = vld [vmem:[#allocation7] sm:$0xff]
          %v251 = vadd.f32 %v250, %v249
          %252 = vst [vmem:[#allocation7] sm:$0xff] %v251
        $region44: #{tpu_custom_call.1} parent=27 // pred_fallthru
          _
        %p253 = scmp.eq.s32.totalorder %s239, 3
        // Predicated region
        $region45: #{tpu_custom_call.1} parent=27 // pred_check
          %p254 = pneg %p253
        $region46: #{tpu_custom_call.1} parent=27 // pred_check_branch
          %256 = sbr.rel (%p254) target = $region48
        $region47: #{tpu_custom_call.1} parent=27 // pred_region
          %v257 = vld [vmem:[%s195] sm:$0xff]
          %v258 = vld [vmem:[%s204] sm:$0xff]
          %v259 = vsub.f32 %v257, %v258
          %v260 = vmul.f32 %v259, %v259
          %s261 = smul.u32 %s239, 8
          %s262 = sadd.s32 %s261, 0
          %v263 = vlaneseq
          %v264 = vshrl.u32 %v263, 7
          %v265 = vstv %s262
          %v266 = vadd.s32 %v265, %v264
          %vm267 = vcmp.lt.s32.totalorder %v266, 26
          %v268 = vsel %vm267, %v260, 0.0
          %v269 = vadd.f32 %v268, 0.0
          %v270 = vadd.f32 %v269, 0.0
          %v271 = vld [vmem:[#allocation7] sm:$0xff]
          %v272 = vadd.f32 %v271, %v270
          %273 = vst [vmem:[#allocation7] sm:$0xff] %v272
        $region48: #{tpu_custom_call.1} parent=27 // pred_fallthru
          _
        // Predicated region
        $region49: #{tpu_custom_call.1} parent=27 // pred_check
          %p274 = pneg %p118
        $region50: #{tpu_custom_call.1} parent=27 // pred_check_branch
          %276 = sbr.rel (%p274) target = $region52
        $region51: #{tpu_custom_call.1} parent=27 // pred_region
          %s278 = ssub.s32 128, 128
          %279 = vsyncadd [#allocation4], %s278
          %s280 = smul.addr %s24, 128
          %s281 = scalar_lea.hbm %s2, %s280
          %s283 = sshll.u32 [#allocation7], 4
          %s284 = int_to_ptr.vmem [resolvable:$true] %s283
          %286 = dma.vmem_to_hbm [thread:$0]  %s284, 128, %s281, [#allocation4]
        $region52: #{tpu_custom_call.1} parent=27 // pred_fallthru
          _
        // Predicated region
        $region53: #{tpu_custom_call.1} parent=27 // pred_check
          %p287 = pneg %p118
        $region54: #{tpu_custom_call.1} parent=27 // pred_check_branch
          %289 = sbr.rel (%p287) target = $region56
        $region55: #{tpu_custom_call.1} parent=27 // pred_region
          %290 = dma.done [#allocation4], 128
        $region56: #{tpu_custom_call.1} parent=27 // pred_fallthru
          _
      $region28: #{tpu_custom_call.1} parent=5 // pred_fallthru
        _
      %p291 = scmp.le.s32.totalorder 2, %s15
      // Predicated region
      $region57: #{tpu_custom_call.1} parent=5 // pred_check
        %p292 = pneg %p291
      $region58: #{tpu_custom_call.1} parent=5 // pred_check_branch
        %294 = sbr.rel (%p292) target = $region60
      $region59: #{tpu_custom_call.1} parent=5 // pred_region
        %s295 = ssub.s32 %s15, 2
      $region60: #{tpu_custom_call.1} parent=5 // pred_fallthru
        _
    $region6: #{tpu_custom_call.1} parent=1 // loop_footer
      %s19 = sadd.s32 1, %s15
    $region7: #{tpu_custom_call.1} parent=1 // loop_footer_branch
      %14 = sbr.rel target = $region3
    $region8: #{tpu_custom_call.1} parent=1 // loop_exit
      _
    %296 = vsyncpa [#allocation3], 1
    %s297 = scalar_lea.sflag [#allocation3], 1
    %298 = vsyncpa %s297, 1
    %299 = vsyncpa [#allocation6], 1
    %s300 = scalar_lea.sflag [#allocation6], 1
    %301 = vsyncpa %s300, 1
    %302 = vsyncpa [#allocation4], 1
    %s303 = scalar_lea.sflag [#allocation4], 1
    %304 = vsyncpa %s303, 1

</llo_original>
